<compile_context>
chip_gen: v7x
topology: tpu7x:2x2x1
jax: 0.10.0
libtpu: 0.0.40
codegen_flags: <defaults>
</compile_context>

<pallas_src>
from functools import partial

import jax
import jax.numpy as jnp
from jax import lax
from jax.experimental import pallas as pl
from jax.experimental.pallas import tpu as pltpu


# Token tables up to this size (and modest vocab width) are kept fully resident
# in VMEM and looked up with a one-hot MXU matmul.
_RESIDENT_TABLE_MAX_BYTES = 4 * 1024 * 1024
_RESIDENT_TABLE_MAX_VOCAB = 2048
_VMEM_LIMIT_BYTES = 64 * 1024 * 1024


def _choose_ts(S, B, H, itemsize, budget_bytes=4 * 1024 * 1024):
    """How many sequence positions to process per grid step.

    ts must divide S and be a multiple of 8 (full-vreg sublanes) unless it
    equals S (full-extent blocks are always layout-legal).  Among the legal
    candidates pick the largest whose double-buffered output block fits a
    modest VMEM budget.
    """
    cands = [t for t in range(8, S + 1, 8) if S % t == 0]
    if S not in cands:
        cands.append(S)
    cands.sort()
    ts = cands[0]
    for t in cands:
        if 2 * t * B * H * itemsize <= budget_bytes:
            ts = t
    return ts


def _pos_expand(R, ts, B, dtype):
    """(R, ts) 0/1 matrix E with E[r, c] = 1 iff c == r // B.

    E @ pos_block replicates each of the ts position rows B times (flat rows
    are s-major, so local row r uses local position r // B) without any
    in-kernel reshape / repeat / integer division.
    """
    r = lax.broadcasted_iota(jnp.int32, (R, ts), 0)
    c = lax.broadcasted_iota(jnp.int32, (R, ts), 1)
    d = r - c * B
    return jnp.logical_and(d >= 0, d < B).astype(dtype)


def _embed_resident_kernel(ids_ref, tok_ref, pos_ref, o_ref, *, B, ts):
    """Small-vocab fast path: token table resident in VMEM, one-hot MXU lookup.

    ids_ref: (R, 1) int32   s-major token ids for this step's R = ts*B rows
    tok_ref: (V, H)         full token table (constant index_map -> resident)
    pos_ref: (ts, H)        position rows for this step
    o_ref:   (R, H)         output rows (s-major flat layout)
    """
    R = ts * B
    V = tok_ref.shape[0]
    ids = ids_ref[...]                                              # (R, 1)
    cols = lax.broadcasted_iota(jnp.int32, (R, V), 1)
    onehot = (cols == ids).astype(tok_ref.dtype)                    # (R, V)
    acc = jnp.dot(onehot, tok_ref[...], preferred_element_type=jnp.float32)
    acc = acc + jnp.dot(_pos_expand(R, ts, B, pos_ref.dtype), pos_ref[...],
                        preferred_element_type=jnp.float32)
    o_ref[...] = acc.astype(o_ref.dtype)


def _embed_gather_kernel(ids_ref, tok_hbm, pos_ref, o_ref, gbuf, sems, *, B, ts):
    """Large-vocab path: manual double-buffered DMA row gather from HBM.

    ids_ref: (S*B,) int32 in SMEM (scalar-prefetched), s-major token ids
    tok_hbm: (V, H) token table left in HBM (memory_space=pl.ANY)
    pos_ref: (ts, H) position rows for this step (auto-pipelined by BlockSpec)
    o_ref:   (R, H) output rows (s-major flat layout)
    gbuf:    (2, R, H) VMEM gather double buffer
    sems:    (2, R) DMA semaphores
    """
    R = ts * B
    i = pl.program_id(0)
    nsteps = pl.num_programs(0)
    slot = i % 2

    def issue(slot_idx, base_row):
        # All R row gathers for one step are in flight simultaneously.
        for r in range(R):
            tok_id = ids_ref[base_row + r]
            pltpu.make_async_copy(tok_hbm.at[tok_id],
                                  gbuf.at[slot_idx, r],
                                  sems.at[slot_idx, r]).start()

    @pl.when(i == 0)
    def _prime():
        issue(0, 0)

    @pl.when(i + 1 < nsteps)
    def _prefetch_next():
        issue(1 - slot, (i + 1) * R)

    # Overlap the position-expansion matmul with the in-flight gather DMAs.
    pos_c = jnp.dot(_pos_expand(R, ts, B, pos_ref.dtype), pos_ref[...],
                    preferred_element_type=jnp.float32)

    for r in range(R):
        pltpu.make_async_copy(tok_hbm.at[0], gbuf.at[slot, r],
                              sems.at[slot, r]).wait()

    o_ref[...] = (gbuf[slot].astype(jnp.float32) + pos_c).astype(o_ref.dtype)


def embedding_forward(input_ids, token_table, pos_table, *, ts=None, path=None,
                      vmem_limit_bytes=_VMEM_LIMIT_BYTES):
    """input_ids: [B, S] int; token_table: [V, H]; pos_table: [S, H].
    Returns [S, B, H] = (token_emb + pos_emb).transpose(0, 1)."""
    B, S = input_ids.shape
    V, H = token_table.shape
    assert pos_table.shape == (S, H)
    itemsize = jnp.dtype(token_table.dtype).itemsize

    if path is None:
        small = (V * H * itemsize <= _RESIDENT_TABLE_MAX_BYTES
                 and V <= _RESIDENT_TABLE_MAX_VOCAB)
        path = "resident" if small else "gather"
    if ts is None:
        ts = _choose_ts(S, B, H, itemsize)
    assert S % ts == 0, f"ts={ts} must divide S={S}"
    R = ts * B
    nsteps = S // ts

    # Flat ids in s-major order: row n = s*B + b -> input_ids[b, s].
    # (Tiny int32 array; the big [S, B, H] output never goes through a transpose.)
    ids_sb = jnp.transpose(input_ids.astype(jnp.int32), (1, 0)).reshape(S * B)

    cost = pl.CostEstimate(
        flops=2 * S * B * H,                        # gather + add (advisory)
        transcendentals=0,
        bytes_accessed=int(itemsize * (S * B * H + V * H + S * H) + 4 * S * B),
    )
    out_shape = jax.ShapeDtypeStruct((S * B, H), token_table.dtype)

    if path == "resident":
        grid_spec = pltpu.PrefetchScalarGridSpec(
            num_scalar_prefetch=0,
            grid=(nsteps,),
            in_specs=[
                pl.BlockSpec((R, 1), lambda i: (i, 0)),     # ids (s-major)
                pl.BlockSpec((V, H), lambda i: (0, 0)),     # token table: VMEM resident
                pl.BlockSpec((ts, H), lambda i: (i, 0)),    # position rows, read once
            ],
            out_specs=pl.BlockSpec((R, H), lambda i: (i, 0)),
        )
        out_flat = pl.pallas_call(
            partial(_embed_resident_kernel, B=B, ts=ts),
            out_shape=out_shape,
            grid_spec=grid_spec,
            compiler_params=pltpu.CompilerParams(
                dimension_semantics=("parallel",),          # rows independent (v7x megacore)
                vmem_limit_bytes=vmem_limit_bytes),
            cost_estimate=cost,
        )(ids_sb.reshape(S * B, 1), token_table, pos_table)
    elif path == "gather":
        grid_spec = pltpu.PrefetchScalarGridSpec(
            num_scalar_prefetch=1,                          # ids -> SMEM
            grid=(nsteps,),
            in_specs=[
                pl.BlockSpec(memory_space=pl.ANY),          # token table stays in HBM
                pl.BlockSpec((ts, H), lambda i, ids: (i, 0)),
            ],
            out_specs=pl.BlockSpec((R, H), lambda i, ids: (i, 0)),
            scratch_shapes=[
                pltpu.VMEM((2, R, H), token_table.dtype),   # gather double buffer
                pltpu.SemaphoreType.DMA((2, R)),
            ],
        )
        out_flat = pl.pallas_call(
            partial(_embed_gather_kernel, B=B, ts=ts),
            out_shape=out_shape,
            grid_spec=grid_spec,
            compiler_params=pltpu.CompilerParams(
                # Cross-step prefetch carries scratch/semaphore state between
                # consecutive grid steps, so this axis must stay sequential.
                dimension_semantics=("arbitrary",),
                vmem_limit_bytes=vmem_limit_bytes),
            cost_estimate=cost,
        )(ids_sb, token_table, pos_table)
    else:
        raise ValueError(f"unknown path: {path}")

    # Rows are already s-major, so this reshape is metadata-only (no transpose,
    # no extra HBM round trip of the output).
    return out_flat.reshape(S, B, H)


if __name__ == "__main__":
    def reference(ids, tok, pos):
        return jnp.transpose(tok[ids] + pos[None, :, :], (1, 0, 2))

    # ---- 1) small-table fast path (resident VMEM table, one-hot MXU lookup) ----
    vocab_size, hidden_size, seq_length, batch_size = 32, 128, 8, 2
    key = jax.random.PRNGKey(0)
    k_tok, k_pos, k_ids = jax.random.split(key, 3)
    token_table = jax.random.normal(k_tok, (vocab_size, hidden_size), jnp.float32)
    pos_table = jax.random.normal(k_pos, (seq_length, hidden_size), jnp.float32)
    input_ids = jax.random.randint(
        k_ids, (batch_size, seq_length), 0, vocab_size, dtype=jnp.int32)

    out = jax.block_until_ready(embedding_forward(input_ids, token_table, pos_table))
    ref = reference(input_ids, token_table, pos_table)
    assert out.shape == (seq_length, batch_size, hidden_size)
    assert jnp.allclose(out, ref, atol=1e-5, rtol=1e-5), "resident path mismatch"

    # ---- 2) large-table path (double-buffered DMA row gather), forced at small
    #         shapes with a multi-step grid so cross-step prefetch is exercised ----
    V2, H2, S2, B2 = 64, 256, 32, 4
    k1, k2, k3 = jax.random.split(jax.random.PRNGKey(1), 3)
    tok2 = jax.random.normal(k1, (V2, H2), jnp.float32)
    pos2 = jax.random.normal(k2, (S2, H2), jnp.float32)
    ids2 = jax.random.randint(k3, (B2, S2), 0, V2, dtype=jnp.int32)

    out2 = jax.block_until_ready(
        embedding_forward(ids2, tok2, pos2, ts=8, path="gather"))
    ref2 = reference(ids2, tok2, pos2)
    assert out2.shape == (S2, B2, H2)
    assert jnp.allclose(out2, ref2, atol=1e-5, rtol=1e-5), "gather path mismatch"

    print("KERNEL_OK")
</pallas_src>

<mosaic_0001>
module attributes {stable_mosaic.version = 11 : i64} {
  func.func @_embed_resident_kernel(%arg0: i32, %arg1: memref<16x1xi32, #tpu.memory_space<vmem>>, %arg2: memref<32x128xf32, #tpu.memory_space<vmem>>, %arg3: memref<8x128xf32, #tpu.memory_space<vmem>>, %arg4: memref<16x128xf32, #tpu.memory_space<vmem>>) attributes {dimension_semantics = [#tpu.dimension_semantics<parallel>], iteration_bounds = array<i64: 1>, scalar_prefetch = 0 : i64, scratch_operands = 0 : i64, tpu.core_type = #tpu.core_type<tc>, window_params = [{transform_indices = @transform_0, window_bounds = array<i64: 16, 1>}, {pipeline_mode = #tpu.pipeline_mode<synchronous>, transform_indices = @transform_1, window_bounds = array<i64: 32, 128>}, {transform_indices = @transform_2, window_bounds = array<i64: 8, 128>}, {transform_indices = @transform_3, window_bounds = array<i64: 16, 128>}]} {
    %c0 = arith.constant 0 : index
    %c0_0 = arith.constant 0 : index
    %0 = vector.load %arg1[%c0, %c0_0] : memref<16x1xi32, #tpu.memory_space<vmem>>, vector<16x1xi32>
    %1 = tpu.iota {dimensions = array<i32: 1>} : vector<16x32xi32>
    %2 = vector.broadcast %0 : vector<16x1xi32> to vector<16x32xi32>
    %3 = arith.cmpi eq, %1, %2 : vector<16x32xi32>
    %4 = arith.extui %3 : vector<16x32xi1> to vector<16x32xi32>
    %5 = arith.sitofp %4 : vector<16x32xi32> to vector<16x32xf32>
    %c0_1 = arith.constant 0 : index
    %c0_2 = arith.constant 0 : index
    %6 = vector.load %arg2[%c0_1, %c0_2] : memref<32x128xf32, #tpu.memory_space<vmem>>, vector<32x128xf32>
    %cst = arith.constant dense<0.000000e+00> : vector<16x128xf32>
    %7 = tpu.matmul %5, %6, %cst {dimension_numbers = #tpu.dot_dimension_numbers<[1], [0], [0], [1], [0, 0, 1, 1], [], []>} : vector<16x32xf32>, vector<32x128xf32>, vector<16x128xf32> -> vector<16x128xf32>
    %8 = tpu.iota {dimensions = array<i32: 0>} : vector<16x8xi32>
    %9 = tpu.iota {dimensions = array<i32: 1>} : vector<16x8xi32>
    %c2_i32 = arith.constant 2 : i32
    %10 = vector.broadcast %c2_i32 : i32 to vector<16x8xi32>
    %11 = arith.muli %9, %10 : vector<16x8xi32>
    %12 = arith.subi %8, %11 : vector<16x8xi32>
    %c0_i32 = arith.constant 0 : i32
    %13 = vector.broadcast %c0_i32 : i32 to vector<16x8xi32>
    %14 = arith.cmpi sge, %12, %13 : vector<16x8xi32>
    %c2_i32_3 = arith.constant 2 : i32
    %15 = vector.broadcast %c2_i32_3 : i32 to vector<16x8xi32>
    %16 = arith.cmpi slt, %12, %15 : vector<16x8xi32>
    %17 = arith.andi %14, %16 : vector<16x8xi1>
    %18 = arith.extui %17 : vector<16x8xi1> to vector<16x8xi32>
    %19 = arith.sitofp %18 : vector<16x8xi32> to vector<16x8xf32>
    %c0_4 = arith.constant 0 : index
    %c0_5 = arith.constant 0 : index
    %20 = vector.load %arg3[%c0_4, %c0_5] : memref<8x128xf32, #tpu.memory_space<vmem>>, vector<8x128xf32>
    %cst_6 = arith.constant dense<0.000000e+00> : vector<16x128xf32>
    %21 = tpu.matmul %19, %20, %cst_6 {dimension_numbers = #tpu.dot_dimension_numbers<[1], [0], [0], [1], [0, 0, 1, 1], [], []>} : vector<16x8xf32>, vector<8x128xf32>, vector<16x128xf32> -> vector<16x128xf32>
    %22 = arith.addf %7, %21 : vector<16x128xf32>
    %c0_7 = arith.constant 0 : index
    %c0_8 = arith.constant 0 : index
    %23 = vector.load %arg4[%c0_7, %c0_8] : memref<16x128xf32, #tpu.memory_space<vmem>>, vector<16x128xf32>
    tpu.vector_store %arg4[%c0_7, %c0_8], %22 {strides = array<i32>} : memref<16x128xf32, #tpu.memory_space<vmem>>, vector<16x128xf32>,
    return
  }
  func.func @transform_0(%arg0: i32) -> (i32, i32) {
    %c0_i32 = arith.constant 0 : i32
    %c0_i32_0 = arith.constant 0 : i32
    return %arg0, %c0_i32 : i32, i32
  }
  func.func @transform_1(%arg0: i32) -> (i32, i32) {
    %c0_i32 = arith.constant 0 : i32
    %c0_i32_0 = arith.constant 0 : i32
    %c0_i32_1 = arith.constant 0 : i32
    return %c0_i32, %c0_i32_0 : i32, i32
  }
  func.func @transform_2(%arg0: i32) -> (i32, i32) {
    %c0_i32 = arith.constant 0 : i32
    %c0_i32_0 = arith.constant 0 : i32
    return %arg0, %c0_i32 : i32, i32
  }
  func.func @transform_3(%arg0: i32) -> (i32, i32) {
    %c0_i32 = arith.constant 0 : i32
    %c0_i32_0 = arith.constant 0 : i32
    return %arg0, %c0_i32 : i32, i32
  }
}

</mosaic_0001>

<llo_original>
// kernel: tpu_custom_call.1
$region0: #{tpu_custom_call.1}
  #allocation0 [shape = 'u32[]', space=smem, size = 0x4, offset = 0x4, fixed_abs, tag = 'smem constant byte address 0x4 - core index']
  #allocation1 [shape = 'u32[144,128]{1,0:T(1,128)}', space=vmem, size = 0x12000, scoped, tag = 'internal scratch']
  %s0 = inlined_call_operand.hbm [shape: s32[16,1], index: 0, kind: input, shape index: {}]
  %s1 = inlined_call_operand.hbm [shape: f32[32,128], index: 1, kind: input, shape index: {}]
  %s2 = inlined_call_operand.hbm [shape: f32[8,128], index: 2, kind: input, shape index: {}]
  %s3 = inlined_call_operand.hbm [shape: f32[16,128], index: 3, kind: output, shape index: {}]
  %s4 = sld [smem:[#allocation0]]
  $region34: #{tpu_custom_call.1} parent=0
    _
  %s6 = ssub.s32 1, %s4
  %s7 = scalar_select 0, %s6, %s4
  $region1: #{tpu_custom_call.1} parent=0
    #allocation2 [shape = 'u8[8192]{0}', space=vmem, size = 0x2000, scoped, tag = 'input window, operand 0, single buffered']
    #allocation3 [shape = 's32[1]{0}', space=sflag, size = 0x4, scoped, tag = 'scoped memory for tpu_custom_call.1']
    #allocation4 [shape = 's32[1]{0}', space=sflag, size = 0x4, scoped, tag = 'scoped memory for tpu_custom_call.1']
    #allocation5 [shape = 'u8[16384]{0}', space=vmem, size = 0x4000, scoped, tag = 'input window, operand 1, single buffered']
    #allocation6 [shape = 's32[1]{0}', space=sflag, size = 0x4, scoped, tag = 'scoped memory for tpu_custom_call.1']
    #allocation7 [shape = 'u8[4096]{0}', space=vmem, size = 0x1000, scoped, tag = 'input window, operand 2, single buffered']
    #allocation8 [shape = 'u8[8192]{0}', space=vmem, size = 0x2000, scoped, tag = 'output window, operand 0, single buffered']
    %8 = vsyncpa [#allocation3], 0
    %9 = vsyncpa [#allocation6], 0
    %10 = vsyncpa [#allocation4], 0
    // Predicated region
    $region2: #{tpu_custom_call.1} parent=1 // pred_check
      _
    $region3: #{tpu_custom_call.1} parent=1 // pred_check_branch
      %12 = sbr.rel (0) target = $region5
    $region4: #{tpu_custom_call.1} parent=1 // pred_region
      %s14 = ssub.s32 256, 256
      %15 = vsyncadd [#allocation3], %s14
      %s16 = sshll.u32 [#allocation2], 4
      %s17 = int_to_ptr.vmem [resolvable:$true] %s16
      %22 = dma.hbm_to_vmem [thread:$0]  %s0, 256, %s17, [#allocation3], 128, 128, 8
    $region5: #{tpu_custom_call.1} parent=1 // pred_fallthru
      _
    // Predicated region
    $region6: #{tpu_custom_call.1} parent=1 // pred_check
      _
    $region7: #{tpu_custom_call.1} parent=1 // pred_check_branch
      %24 = sbr.rel (0) target = $region9
    $region8: #{tpu_custom_call.1} parent=1 // pred_region
      %s26 = ssub.s32 512, 512
      %27 = vsyncadd [#allocation6], %s26
      %s28 = sshll.u32 [#allocation5], 4
      %s29 = int_to_ptr.vmem [resolvable:$true] %s28
      %34 = dma.hbm_to_vmem [thread:$0]  %s1, 512, %s29, [#allocation6], 128, 128, 8
    $region9: #{tpu_custom_call.1} parent=1 // pred_fallthru
      _
    // Predicated region
    $region10: #{tpu_custom_call.1} parent=1 // pred_check
      _
    $region11: #{tpu_custom_call.1} parent=1 // pred_check_branch
      %36 = sbr.rel (0) target = $region13
    $region12: #{tpu_custom_call.1} parent=1 // pred_region
      %s38 = ssub.s32 128, 128
      %39 = vsyncadd [#allocation6], %s38
      %s41 = sshll.u32 [#allocation7], 4
      %s42 = int_to_ptr.vmem [resolvable:$true] %s41
      %44 = dma.hbm_to_vmem [thread:$0]  %s2, 128, %s42, [#allocation6]
    $region13: #{tpu_custom_call.1} parent=1 // pred_fallthru
      _
    // Predicated region
    $region14: #{tpu_custom_call.1} parent=1 // pred_check
      _
    $region15: #{tpu_custom_call.1} parent=1 // pred_check_branch
      %46 = sbr.rel (0) target = $region17
    $region16: #{tpu_custom_call.1} parent=1 // pred_region
      %47 = dma.done [#allocation3], 256
    $region17: #{tpu_custom_call.1} parent=1 // pred_fallthru
      _
    // Predicated region
    $region18: #{tpu_custom_call.1} parent=1 // pred_check
      _
    $region19: #{tpu_custom_call.1} parent=1 // pred_check_branch
      %49 = sbr.rel (0) target = $region21
    $region20: #{tpu_custom_call.1} parent=1 // pred_region
      %50 = dma.done [#allocation6], 512
    $region21: #{tpu_custom_call.1} parent=1 // pred_fallthru
      _
    // Predicated region
    $region22: #{tpu_custom_call.1} parent=1 // pred_check
      _
    $region23: #{tpu_custom_call.1} parent=1 // pred_check_branch
      %52 = sbr.rel (0) target = $region25
    $region24: #{tpu_custom_call.1} parent=1 // pred_region
      %53 = dma.done [#allocation6], 128
    $region25: #{tpu_custom_call.1} parent=1 // pred_fallthru
      _
    %v54 = vld [vmem:[#allocation2] sm:$0xff]
    %v55 = vld [vmem:[#allocation2 + $0x8] sm:$0xff]
    %v56 = vlaneseq
    %v57 = vand.u32 %v56, 127
    %58 = vset.pattern.permute.xlu0 0
    %59 = vperm.xlu0 %58, %v54
    %v60 = vpop.permute.xlu0 %59
    %61 = vset.pattern.permute.xlu0 0
    %62 = vperm.xlu0 %61, %v55
    %v63 = vpop.permute.xlu0 %62
    %vm64 = vcmp.eq.s32.totalorder %v57, %v60
    %vm65 = vcmp.eq.s32.totalorder %v57, %v63
    %v66 = vsel %vm64, 1, 0
    %v67 = vsel %vm65, 1, 0
    %v68 = vcvt.s32.f32 %v66
    %v69 = vcvt.s32.f32 %v67
    %v70 = vld [vmem:[#allocation5] sm:$0xff]
    %v71 = vld [vmem:[#allocation5 + $0x8] sm:$0xff]
    %v72 = vld [vmem:[#allocation5 + $0x10] sm:$0xff]
    %v73 = vld [vmem:[#allocation5 + $0x18] sm:$0xff]
    %v74 = vlaneseq
    %v75 = vshrl.u32 %v74, 7
    %v76 = vadd.s32 %v75, 8
    %v77 = vmul.u32 %v57, 2
    %v78 = vsub.s32 %v75, %v77
    %v79 = vsub.s32 %v76, %v77
    %vm80 = vcmp.ge.s32.totalorder %v78, 0
    %vm81 = vcmp.ge.s32.totalorder %v79, 0
    %vm82 = vcmp.lt.s32.totalorder %v78, 2
    %vm83 = vcmp.lt.s32.totalorder %v79, 2
    %vm84 = vmand %vm80, %vm82
    %vm85 = vmand %vm81, %vm83
    %v86 = vsel %vm84, 1, 0
    %v87 = vsel %vm85, 1, 0
    %v88 = vcvt.s32.f32 %v86
    %v89 = vcvt.s32.f32 %v87
    %v90 = vld [vmem:[#allocation7] sm:$0xff]
    %vm91 = vcmask 64512
    %v93 = vsel %vm91, %v88, 0
    %v96 = vsel %vm91, %v89, 0
    %98 = vmatprep.subr.mxu0 0.0
    %99 = vmatpush1.msra.mxu0 %v90
    %100 = vmatprep.subr.mxu0 0.0
    %101 = vmatpush1.msra.mxu0 0.0
    %102 = vmatprep.subr.mxu0 0.0
    %103 = vmatpush1.msra.mxu0 0.0
    %104 = vmatprep.subr.mxu0 0.0
    %105 = vmatpush1.msra.mxu0 0.0
    %106 = vmatprep.subr.mxu0 0.0
    %107 = vmatpush1.msra.mxu0 0.0
    %108 = vmatprep.subr.mxu0 0.0
    %109 = vmatpush1.msra.mxu0 0.0
    %110 = vmatprep.subr.mxu0 0.0
    %111 = vmatpush1.msra.mxu0 0.0
    %112 = vmatprep.subr.mxu0 0.0
    %113 = vmatpush1.msra.mxu0 0.0
    %114 = vmatprep.subr.mxu0 0.0
    %115 = vmatpush1.msra.mxu0 0.0
    %116 = vmatprep.subr.mxu0 0.0
    %117 = vmatpush1.msra.mxu0 0.0
    %118 = vmatprep.subr.mxu0 0.0
    %119 = vmatpush1.msra.mxu0 0.0
    %120 = vmatprep.subr.mxu0 0.0
    %121 = vmatpush1.msra.mxu0 0.0
    %122 = vmatprep.subr.mxu0 0.0
    %123 = vmatpush1.msra.mxu0 0.0
    %124 = vmatprep.subr.mxu0 0.0
    %125 = vmatpush1.msra.mxu0 0.0
    %126 = vmatprep.subr.mxu0 0.0
    %127 = vmatpush1.msra.mxu0 0.0
    %128 = vmatprep.subr.mxu0 0.0
    %129 = vmatpush1.msra.mxu0 0.0
    %130 = vmatprep.subr.mxu0 0.0
    %131 = vmatpush1.msra.mxu0 0.0
    %132 = vmatprep.subr.mxu0 0.0
    %133 = vmatpush1.msra.mxu0 0.0
    %134 = vmatprep.subr.mxu0 0.0
    %135 = vmatpush1.msra.mxu0 0.0
    %136 = vmatprep.subr.mxu0 0.0
    %137 = vmatpush1.msra.mxu0 0.0
    %138 = vmatprep.subr.mxu0 0.0
    %139 = vmatpush1.msra.mxu0 0.0
    %140 = vmatprep.subr.mxu0 0.0
    %141 = vmatpush1.msra.mxu0 0.0
    %142 = vmatprep.subr.mxu0 0.0
    %143 = vmatpush1.msra.mxu0 0.0
    %144 = vmatprep.subr.mxu0 0.0
    %145 = vmatpush1.msra.mxu0 0.0
    %146 = vmatprep.subr.mxu0 0.0
    %147 = vmatpush1.msra.mxu0 0.0
    %148 = vmatprep.subr.mxu0 0.0
    %149 = vmatpush1.msra.mxu0 0.0
    %150 = vmatprep.subr.mxu0 0.0
    %151 = vmatpush1.msra.mxu0 0.0
    %152 = vmatprep.subr.mxu0 0.0
    %153 = vmatpush1.msra.mxu0 0.0
    %154 = vmatprep.subr.mxu0 0.0
    %155 = vmatpush1.msra.mxu0 0.0
    %156 = vmatprep.subr.mxu0 0.0
    %157 = vmatpush1.msra.mxu0 0.0
    %158 = vmatprep.subr.mxu0 0.0
    %159 = vmatpush1.msra.mxu0 0.0
    %160 = vmatprep.subr.mxu0 0.0
    %161 = vmatpush1.msra.mxu0 0.0
    %162 = vmatprep.mubr.f32.mxu0 0.0
    %163 = vmatmul.mubr.f32.gmra.mrb[0].mxu0 %v93
    %v164 = vpop.f32.mrb[0].mxu0
    %v165 = vadd.f32 0.0, %v164
    %v166 = vpop.f32.mrb[0].mxu0
    %167 = vmatprep.mubr.f32.mxu0 0.0
    %168 = vmatmul.mubr.f32.gmra.mrb[0].mxu0 %v96
    %v169 = vpop.f32.mrb[0].mxu0
    %v170 = vadd.f32 0.0, %v169
    %v171 = vpop.f32.mrb[0].mxu0
    %172 = vdwg.mxu0
    %vm173 = vcmask 261120
    %v175 = vsel %vm173, %v68, 0
    %v178 = vsel %vm173, %v69, 0
    %180 = vmatprep.subr.mxu0 0.0
    %181 = vmatpush1.msra.mxu0 %v70
    %182 = vmatprep.subr.mxu0 0.0
    %183 = vmatpush1.msra.mxu0 %v71
    %184 = vmatprep.subr.mxu0 0.0
    %185 = vmatpush1.msra.mxu0 %v72
    %186 = vmatprep.subr.mxu0 0.0
    %187 = vmatpush1.msra.mxu0 %v73
    %188 = vmatprep.subr.mxu0 0.0
    %189 = vmatpush1.msra.mxu0 0.0
    %190 = vmatprep.subr.mxu0 0.0
    %191 = vmatpush1.msra.mxu0 0.0
    %192 = vmatprep.subr.mxu0 0.0
    %193 = vmatpush1.msra.mxu0 0.0
    %194 = vmatprep.subr.mxu0 0.0
    %195 = vmatpush1.msra.mxu0 0.0
    %196 = vmatprep.subr.mxu0 0.0
    %197 = vmatpush1.msra.mxu0 0.0
    %198 = vmatprep.subr.mxu0 0.0
    %199 = vmatpush1.msra.mxu0 0.0
    %200 = vmatprep.subr.mxu0 0.0
    %201 = vmatpush1.msra.mxu0 0.0
    %202 = vmatprep.subr.mxu0 0.0
    %203 = vmatpush1.msra.mxu0 0.0
    %204 = vmatprep.subr.mxu0 0.0
    %205 = vmatpush1.msra.mxu0 0.0
    %206 = vmatprep.subr.mxu0 0.0
    %207 = vmatpush1.msra.mxu0 0.0
    %208 = vmatprep.subr.mxu0 0.0
    %209 = vmatpush1.msra.mxu0 0.0
    %210 = vmatprep.subr.mxu0 0.0
    %211 = vmatpush1.msra.mxu0 0.0
    %212 = vmatprep.subr.mxu0 0.0
    %213 = vmatpush1.msra.mxu0 0.0
    %214 = vmatprep.subr.mxu0 0.0
    %215 = vmatpush1.msra.mxu0 0.0
    %216 = vmatprep.subr.mxu0 0.0
    %217 = vmatpush1.msra.mxu0 0.0
    %218 = vmatprep.subr.mxu0 0.0
    %219 = vmatpush1.msra.mxu0 0.0
    %220 = vmatprep.subr.mxu0 0.0
    %221 = vmatpush1.msra.mxu0 0.0
    %222 = vmatprep.subr.mxu0 0.0
    %223 = vmatpush1.msra.mxu0 0.0
    %224 = vmatprep.subr.mxu0 0.0
    %225 = vmatpush1.msra.mxu0 0.0
    %226 = vmatprep.subr.mxu0 0.0
    %227 = vmatpush1.msra.mxu0 0.0
    %228 = vmatprep.subr.mxu0 0.0
    %229 = vmatpush1.msra.mxu0 0.0
    %230 = vmatprep.subr.mxu0 0.0
    %231 = vmatpush1.msra.mxu0 0.0
    %232 = vmatprep.subr.mxu0 0.0
    %233 = vmatpush1.msra.mxu0 0.0
    %234 = vmatprep.subr.mxu0 0.0
    %235 = vmatpush1.msra.mxu0 0.0
    %236 = vmatprep.subr.mxu0 0.0
    %237 = vmatpush1.msra.mxu0 0.0
    %238 = vmatprep.subr.mxu0 0.0
    %239 = vmatpush1.msra.mxu0 0.0
    %240 = vmatprep.subr.mxu0 0.0
    %241 = vmatpush1.msra.mxu0 0.0
    %242 = vmatprep.subr.mxu0 0.0
    %243 = vmatpush1.msra.mxu0 0.0
    %244 = vmatprep.mubr.f32.mxu0 0.0
    %245 = vmatmul.mubr.f32.gmra.mrb[0].mxu0 %v175
    %v246 = vpop.f32.mrb[0].mxu0
    %v247 = vadd.f32 %v165, %v246
    %v248 = vpop.f32.mrb[0].mxu0
    %249 = vmatprep.mubr.f32.mxu0 0.0
    %250 = vmatmul.mubr.f32.gmra.mrb[0].mxu0 %v178
    %v251 = vpop.f32.mrb[0].mxu0
    %v252 = vadd.f32 %v170, %v251
    %v253 = vpop.f32.mrb[0].mxu0
    %254 = vdwg.mxu0
    %255 = vst [vmem:[#allocation8] sm:$0xff] %v247
    %256 = vst [vmem:[#allocation8 + $0x8] sm:$0xff] %v252
    // Predicated region
    $region26: #{tpu_custom_call.1} parent=1 // pred_check
      _
    $region27: #{tpu_custom_call.1} parent=1 // pred_check_branch
      %258 = sbr.rel (0) target = $region29
    $region28: #{tpu_custom_call.1} parent=1 // pred_region
      %s260 = ssub.s32 256, 256
      %261 = vsyncadd [#allocation4], %s260
      %s262 = sshll.u32 [#allocation8], 4
      %s263 = int_to_ptr.vmem [resolvable:$true] %s262
      %268 = dma.vmem_to_hbm [thread:$0]  %s263, 256, %s3, [#allocation4], 128, 128, 8
    $region29: #{tpu_custom_call.1} parent=1 // pred_fallthru
      _
    // Predicated region
    $region30: #{tpu_custom_call.1} parent=1 // pred_check
      _
    $region31: #{tpu_custom_call.1} parent=1 // pred_check_branch
      %270 = sbr.rel (0) target = $region33
    $region32: #{tpu_custom_call.1} parent=1 // pred_region
      %271 = dma.done [#allocation4], 256
    $region33: #{tpu_custom_call.1} parent=1 // pred_fallthru
      _
    %272 = vsyncpa [#allocation3], 1
    %273 = vsyncpa [#allocation6], 1
    %274 = vsyncpa [#allocation4], 1

</llo_original>
